<compile_context>
chip_gen: v7x
topology: tpu7x:2x2x1
jax: 0.10.0
libtpu: 0.0.40
codegen_flags: <defaults>
</compile_context>

<pallas_src>
import jax
import jax.numpy as jnp
from jax.experimental import pallas as pl
from jax.experimental.pallas import tpu as pltpu

BN_EPS = 1e-5                      # nn.BatchNorm2d default
ROWS_PER_STEP = 8192               # target MXU rows (= bt*nt) per grid step
VMEM_LIMIT_BYTES = 48 * 1024 * 1024


def _make_mlp_max_kernel(num_layers, bt, nt):
    """Fused (Conv1x1+BN+ReLU) x num_layers + running max-over-points kernel."""

    def kernel(*refs):
        x_ref = refs[0]          # (bt, nt, c_in_pad) bf16
        o_ref = refs[-1]         # (bt, c_out)        f32, running max (resident over n axis)
        wb = refs[1:-1]          # w1, b1, w2, b2, ...

        n_idx = pl.program_id(1)
        rows = bt * nt

        # Flatten batch*points into the matmul M dimension so the MXU rows fill up.
        h = x_ref[...].reshape(rows, x_ref.shape[-1])            # bf16
        for i in range(num_layers):
            w = wb[2 * i][...]                                   # bf16 (cin, cout)
            b = wb[2 * i + 1][...]                               # f32  (1, cout)
            y = jnp.dot(h, w, preferred_element_type=jnp.float32) + b
            if i + 1 < num_layers:
                # bf16 hidden activations: next dot consumed bf16 anyway; halves VMEM/vst.
                h = jnp.maximum(y, 0.0).astype(jnp.bfloat16)
            else:
                h = jnp.maximum(y, 0.0)                          # final layer f32 for the max

        c_out = h.shape[-1]
        # Point dim was edge-padded in the wrapper -> no mask needed here.
        tile_max = jnp.max(h.reshape(bt, nt, c_out), axis=1)     # (bt, c_out)

        @pl.when(n_idx == 0)
        def _():
            o_ref[...] = tile_max

        @pl.when(n_idx > 0)
        def _():
            o_ref[...] = jnp.maximum(o_ref[...], tile_max)

    return kernel


def _choose_tiles(batch, n_points, rows_target=ROWS_PER_STEP):
    """Pick (bt, nt, n_pad) with bt*nt ~ rows_target.

    bt is either the full batch or a multiple of 8 (legal (bt, c_out) output block);
    nt is either the full point count or a multiple of 8; n_pad = num_point_tiles * nt.
    """
    if batch * n_points <= rows_target:
        return batch, n_points, n_points
    if batch <= 8:
        bt = batch
    else:
        bt = min((batch // 8) * 8, max(8, (rows_target // n_points) // 8 * 8))
    nt_budget = max(8, rows_target // bt)
    if n_points <= nt_budget:
        nt = n_points
    else:
        k = pl.cdiv(n_points, nt_budget)            # number of point tiles
        nt = pl.cdiv(pl.cdiv(n_points, k), 8) * 8   # ceil(N/k), rounded up to a multiple of 8
    n_pad = pl.cdiv(n_points, nt) * nt
    return bt, nt, n_pad


def pointnet_set_abstraction_forward(xyz, points, folded_params):
    """group_all=True forward. xyz: (B, 3, N), points: (B, D, N) -> (new_xyz, new_points)."""
    # TODO(synk): group_all=False branch (sequential farthest-point sampling + sort-based
    # ball query) has no clean Pallas equivalent; only group_all=True is implemented here.
    B, _, N = xyz.shape
    D = points.shape[1]

    bt, nt, n_pad = _choose_tiles(B, N)

    # Wrapper prep (one fused XLA copy): cast to bf16 FIRST (halves transpose/concat
    # traffic), transpose to (B, N, C), concat [points, xyz] (spec's channel order),
    # edge-replicate-pad N to a multiple of nt (max() unaffected by duplicated points),
    # and zero-pad channels to a multiple of 8 (never 128).
    feat = jnp.concatenate(
        [jnp.transpose(points.astype(jnp.bfloat16), (0, 2, 1)),
         jnp.transpose(xyz.astype(jnp.bfloat16), (0, 2, 1))], axis=-1)   # (B, N, C_in) bf16
    c_in = feat.shape[-1]
    c_in_pad = -(-c_in // 8) * 8
    if n_pad != N:
        feat = jnp.pad(feat, ((0, 0), (0, n_pad - N), (0, 0)), mode='edge')
    if c_in_pad != c_in:
        feat = jnp.pad(feat, ((0, 0), (0, 0), (0, c_in_pad - c_in)))

    # Weights -> bf16 (layer-1 cin rows zero-padded to match), biases stay f32.
    ws, bs = [], []
    for li, (w, b) in enumerate(folded_params):
        if li == 0 and c_in_pad != c_in:
            w = jnp.pad(w, ((0, c_in_pad - c_in), (0, 0)))
        ws.append(w.astype(jnp.bfloat16))
        bs.append(b.astype(jnp.float32).reshape(1, -1))
    c_out = ws[-1].shape[1]

    nb, nn = pl.cdiv(B, bt), n_pad // nt
    kernel = _make_mlp_max_kernel(len(ws), bt, nt)

    def const_spec(shape):
        # Constant block index -> Pallas fetches weights/biases once, not per grid step.
        return pl.BlockSpec(shape, lambda b, n: (0,) * len(shape))

    wb_args, wb_specs = [], []
    for w, b in zip(ws, bs):
        wb_args += [w, b]
        wb_specs += [const_spec(w.shape), const_spec(b.shape)]

    # Note: if B % bt != 0, the last batch block extends past B; Pallas discards the
    # out-of-bounds output rows and in-bounds rows only depend on in-bounds inputs.
    out = pl.pallas_call(
        kernel,
        out_shape=jax.ShapeDtypeStruct((B, c_out), jnp.float32),
        grid_spec=pltpu.PrefetchScalarGridSpec(
            num_scalar_prefetch=0,
            grid=(nb, nn),                                        # point-tile (reduction) axis last
            in_specs=[pl.BlockSpec((bt, nt, c_in_pad), lambda b, n: (b, n, 0))] + wb_specs,
            out_specs=pl.BlockSpec((bt, c_out), lambda b, n: (b, 0)),   # lane-dense, resident over n
        ),
        compiler_params=pltpu.CompilerParams(
            dimension_semantics=("parallel", "arbitrary"),
            vmem_limit_bytes=VMEM_LIMIT_BYTES),
    )(feat, *wb_args)

    new_points = out[:, :, None]                                  # (B, C_out, 1) == torch.max(., 2)[0]
    # Spec's sample_group_all builds centroid from points' channel count -> zeros(B, D, 1).
    new_xyz = jnp.zeros((B, D, 1), jnp.float32)
    return new_xyz, new_points


def make_params(key, in_channel, mlp):
    """Build Conv2d(k=1) + eval-mode BatchNorm2d params and fold BN into the conv."""
    dims = [in_channel] + list(mlp)
    folded = []
    for i in range(len(dims) - 1):
        cin, cout = dims[i], dims[i + 1]
        key, k_w, k_b, k_g, k_be, k_m, k_v = jax.random.split(key, 7)
        # Conv2d(cin, cout, 1) weight (cout, cin, 1, 1) -> stored here as (cin, cout)
        w = jax.random.normal(k_w, (cin, cout), jnp.float32) * (1.0 / jnp.sqrt(cin))
        b = jax.random.normal(k_b, (cout,), jnp.float32) * 0.05
        gamma = jax.random.uniform(k_g, (cout,), jnp.float32, 0.8, 1.2)
        beta = jax.random.normal(k_be, (cout,), jnp.float32) * 0.1
        r_mean = jax.random.normal(k_m, (cout,), jnp.float32) * 0.1
        r_var = jax.random.uniform(k_v, (cout,), jnp.float32, 0.5, 1.5)
        # Eval-mode BN fold: BN(Wx + b) = (W*s) x + (s*(b - mean) + beta), s = gamma/sqrt(var+eps)
        s = gamma / jnp.sqrt(r_var + BN_EPS)
        folded.append((w * s[None, :], s * (b - r_mean) + beta))
    return folded


def set_abstraction_ref(xyz, points, folded_params):
    """Plain-JAX f32 reference of the same (BN-folded, group_all=True) forward pass."""
    h = jnp.concatenate(
        [jnp.transpose(points, (0, 2, 1)), jnp.transpose(xyz, (0, 2, 1))], axis=-1
    ).astype(jnp.float32)
    for w, b in folded_params:
        h = jax.nn.relu(jnp.einsum('bnc,cd->bnd', h, w) + b[None, None, :])
    new_points = jnp.max(h, axis=1)[:, :, None]                  # (B, C_out, 1)
    new_xyz = jnp.zeros((xyz.shape[0], points.shape[1], 1), jnp.float32)
    return new_xyz, new_points


if __name__ == "__main__":
    key = jax.random.PRNGKey(0)
    k_xyz, k_pts, k_p = jax.random.split(key, 3)

    # Small shapes: B=2 clouds, N=16 points, D=3 extra features -> in_channel = 3 + 3 = 6
    B, N, D = 2, 16, 3
    MLP = (128, 128, 256)   # docstring example: mlp=[128, 128, 256]

    xyz = jax.random.normal(k_xyz, (B, 3, N), jnp.float32)
    points = jax.random.normal(k_pts, (B, D, N), jnp.float32)
    params = make_params(k_p, in_channel=D + 3, mlp=MLP)

    new_xyz, new_points = pointnet_set_abstraction_forward(xyz, points, params)
    new_points = jax.block_until_ready(new_points)
    new_xyz = jax.block_until_ready(new_xyz)

    ref_xyz, ref_points = set_abstraction_ref(xyz, points, params)
    ref_points = jax.block_until_ready(ref_points)

    assert new_xyz.shape == (B, D, 1), new_xyz.shape
    assert new_points.shape == (B, MLP[-1], 1), new_points.shape
    assert jnp.allclose(new_xyz, ref_xyz), "new_xyz mismatch"
    # bf16 matmul inputs / hidden activations (f32 accumulate) -> looser tolerance than pure f32
    assert jnp.allclose(new_points, ref_points, rtol=3e-2, atol=3e-2), "mismatch vs JAX reference"

    print("KERNEL_OK")
</pallas_src>

<mosaic_0001>
module attributes {stable_mosaic.version = 11 : i64} {
  func.func @kernel(%arg0: i32, %arg1: i32, %arg2: memref<2x16x8xbf16, #tpu.memory_space<vmem>>, %arg3: memref<8x128xbf16, #tpu.memory_space<vmem>>, %arg4: memref<1x128xf32, #tpu.memory_space<vmem>>, %arg5: memref<128x128xbf16, #tpu.memory_space<vmem>>, %arg6: memref<1x128xf32, #tpu.memory_space<vmem>>, %arg7: memref<128x256xbf16, #tpu.memory_space<vmem>>, %arg8: memref<1x256xf32, #tpu.memory_space<vmem>>, %arg9: memref<2x256xf32, #tpu.memory_space<vmem>>) attributes {dimension_semantics = [#tpu.dimension_semantics<parallel>, #tpu.dimension_semantics<arbitrary>], iteration_bounds = array<i64: 1, 1>, scalar_prefetch = 0 : i64, scratch_operands = 0 : i64, tpu.core_type = #tpu.core_type<tc>, window_params = [{transform_indices = @transform_0, window_bounds = array<i64: 2, 16, 8>}, {pipeline_mode = #tpu.pipeline_mode<synchronous>, transform_indices = @transform_1, window_bounds = array<i64: 8, 128>}, {pipeline_mode = #tpu.pipeline_mode<synchronous>, transform_indices = @transform_2, window_bounds = array<i64: 1, 128>}, {pipeline_mode = #tpu.pipeline_mode<synchronous>, transform_indices = @transform_3, window_bounds = array<i64: 128, 128>}, {pipeline_mode = #tpu.pipeline_mode<synchronous>, transform_indices = @transform_4, window_bounds = array<i64: 1, 128>}, {pipeline_mode = #tpu.pipeline_mode<synchronous>, transform_indices = @transform_5, window_bounds = array<i64: 128, 256>}, {pipeline_mode = #tpu.pipeline_mode<synchronous>, transform_indices = @transform_6, window_bounds = array<i64: 1, 256>}, {transform_indices = @transform_7, window_bounds = array<i64: 2, 256>}]} {
    %c0 = arith.constant 0 : index
    %c0_0 = arith.constant 0 : index
    %c0_1 = arith.constant 0 : index
    %0 = vector.load %arg2[%c0, %c0_0, %c0_1] : memref<2x16x8xbf16, #tpu.memory_space<vmem>>, vector<2x16x8xbf16>
    %1 = vector.shape_cast %0 : vector<2x16x8xbf16> to vector<32x8xbf16>
    %c0_2 = arith.constant 0 : index
    %c0_3 = arith.constant 0 : index
    %2 = vector.load %arg3[%c0_2, %c0_3] : memref<8x128xbf16, #tpu.memory_space<vmem>>, vector<8x128xbf16>
    %c0_4 = arith.constant 0 : index
    %c0_5 = arith.constant 0 : index
    %3 = vector.load %arg4[%c0_4, %c0_5] : memref<1x128xf32, #tpu.memory_space<vmem>>, vector<1x128xf32>
    %cst = arith.constant dense<0.000000e+00> : vector<32x128xf32>
    %4 = tpu.matmul %1, %2, %cst {dimension_numbers = #tpu.dot_dimension_numbers<[1], [0], [0], [1], [0, 0, 1, 1], [], []>} : vector<32x8xbf16>, vector<8x128xbf16>, vector<32x128xf32> -> vector<32x128xf32>
    %5 = vector.broadcast %3 : vector<1x128xf32> to vector<32x128xf32>
    %6 = arith.addf %4, %5 : vector<32x128xf32>
    %cst_6 = arith.constant 0.000000e+00 : f32
    %7 = vector.broadcast %cst_6 : f32 to vector<32x128xf32>
    %8 = arith.maximumf %6, %7 : vector<32x128xf32>
    %9 = arith.truncf %8 : vector<32x128xf32> to vector<32x128xbf16>
    %c0_7 = arith.constant 0 : index
    %c0_8 = arith.constant 0 : index
    %10 = vector.load %arg5[%c0_7, %c0_8] : memref<128x128xbf16, #tpu.memory_space<vmem>>, vector<128x128xbf16>
    %c0_9 = arith.constant 0 : index
    %c0_10 = arith.constant 0 : index
    %11 = vector.load %arg6[%c0_9, %c0_10] : memref<1x128xf32, #tpu.memory_space<vmem>>, vector<1x128xf32>
    %cst_11 = arith.constant dense<0.000000e+00> : vector<32x128xf32>
    %12 = tpu.matmul %9, %10, %cst_11 {dimension_numbers = #tpu.dot_dimension_numbers<[1], [0], [0], [1], [0, 0, 1, 1], [], []>} : vector<32x128xbf16>, vector<128x128xbf16>, vector<32x128xf32> -> vector<32x128xf32>
    %13 = vector.broadcast %11 : vector<1x128xf32> to vector<32x128xf32>
    %14 = arith.addf %12, %13 : vector<32x128xf32>
    %cst_12 = arith.constant 0.000000e+00 : f32
    %15 = vector.broadcast %cst_12 : f32 to vector<32x128xf32>
    %16 = arith.maximumf %14, %15 : vector<32x128xf32>
    %17 = arith.truncf %16 : vector<32x128xf32> to vector<32x128xbf16>
    %c0_13 = arith.constant 0 : index
    %c0_14 = arith.constant 0 : index
    %18 = vector.load %arg7[%c0_13, %c0_14] : memref<128x256xbf16, #tpu.memory_space<vmem>>, vector<128x256xbf16>
    %c0_15 = arith.constant 0 : index
    %c0_16 = arith.constant 0 : index
    %19 = vector.load %arg8[%c0_15, %c0_16] : memref<1x256xf32, #tpu.memory_space<vmem>>, vector<1x256xf32>
    %cst_17 = arith.constant dense<0.000000e+00> : vector<32x256xf32>
    %20 = tpu.matmul %17, %18, %cst_17 {dimension_numbers = #tpu.dot_dimension_numbers<[1], [0], [0], [1], [0, 0, 1, 1], [], []>} : vector<32x128xbf16>, vector<128x256xbf16>, vector<32x256xf32> -> vector<32x256xf32>
    %21 = vector.broadcast %19 : vector<1x256xf32> to vector<32x256xf32>
    %22 = arith.addf %20, %21 : vector<32x256xf32>
    %cst_18 = arith.constant 0.000000e+00 : f32
    %23 = vector.broadcast %cst_18 : f32 to vector<32x256xf32>
    %24 = arith.maximumf %22, %23 : vector<32x256xf32>
    %25 = vector.shape_cast %24 : vector<32x256xf32> to vector<2x16x256xf32>
    %cst_19 = arith.constant dense<0xFF800000> : vector<2x256xf32>
    %26 = vector.multi_reduction <maximumf>, %25, %cst_19 [1] : vector<2x16x256xf32> to vector<2x256xf32>
    %c0_i32 = arith.constant 0 : i32
    %27 = arith.cmpi eq, %arg1, %c0_i32 : i32
    %28 = arith.extui %27 : i1 to i32
    %c0_i32_20 = arith.constant 0 : i32
    %29 = arith.cmpi ne, %28, %c0_i32_20 : i32
    scf.if %29 {
      %c0_23 = arith.constant 0 : index
      %c0_24 = arith.constant 0 : index
      %33 = vector.load %arg9[%c0_23, %c0_24] : memref<2x256xf32, #tpu.memory_space<vmem>>, vector<2x256xf32>
      tpu.vector_store %arg9[%c0_23, %c0_24], %26 {strides = array<i32>} : memref<2x256xf32, #tpu.memory_space<vmem>>, vector<2x256xf32>,
    } else {
    }
    %c0_i32_21 = arith.constant 0 : i32
    %30 = arith.cmpi sgt, %arg1, %c0_i32_21 : i32
    %31 = arith.extui %30 : i1 to i32
    %c0_i32_22 = arith.constant 0 : i32
    %32 = arith.cmpi ne, %31, %c0_i32_22 : i32
    scf.if %32 {
      %c0_23 = arith.constant 0 : index
      %c0_24 = arith.constant 0 : index
      %33 = vector.load %arg9[%c0_23, %c0_24] : memref<2x256xf32, #tpu.memory_space<vmem>>, vector<2x256xf32>
      %34 = arith.maximumf %33, %26 : vector<2x256xf32>
      %c0_25 = arith.constant 0 : index
      %c0_26 = arith.constant 0 : index
      %35 = vector.load %arg9[%c0_25, %c0_26] : memref<2x256xf32, #tpu.memory_space<vmem>>, vector<2x256xf32>
      tpu.vector_store %arg9[%c0_25, %c0_26], %34 {strides = array<i32>} : memref<2x256xf32, #tpu.memory_space<vmem>>, vector<2x256xf32>,
    } else {
    }
    return
  }
  func.func @transform_0(%arg0: i32, %arg1: i32) -> (i32, i32, i32) {
    %c0_i32 = arith.constant 0 : i32
    %c0_i32_0 = arith.constant 0 : i32
    return %arg0, %arg1, %c0_i32 : i32, i32, i32
  }
  func.func @transform_1(%arg0: i32, %arg1: i32) -> (i32, i32) {
    %c0_i32 = arith.constant 0 : i32
    %c0_i32_0 = arith.constant 0 : i32
    %c0_i32_1 = arith.constant 0 : i32
    return %c0_i32, %c0_i32_0 : i32, i32
  }
  func.func @transform_2(%arg0: i32, %arg1: i32) -> (i32, i32) {
    %c0_i32 = arith.constant 0 : i32
    %c0_i32_0 = arith.constant 0 : i32
    %c0_i32_1 = arith.constant 0 : i32
    return %c0_i32, %c0_i32_0 : i32, i32
  }
  func.func @transform_3(%arg0: i32, %arg1: i32) -> (i32, i32) {
    %c0_i32 = arith.constant 0 : i32
    %c0_i32_0 = arith.constant 0 : i32
    %c0_i32_1 = arith.constant 0 : i32
    return %c0_i32, %c0_i32_0 : i32, i32
  }
  func.func @transform_4(%arg0: i32, %arg1: i32) -> (i32, i32) {
    %c0_i32 = arith.constant 0 : i32
    %c0_i32_0 = arith.constant 0 : i32
    %c0_i32_1 = arith.constant 0 : i32
    return %c0_i32, %c0_i32_0 : i32, i32
  }
  func.func @transform_5(%arg0: i32, %arg1: i32) -> (i32, i32) {
    %c0_i32 = arith.constant 0 : i32
    %c0_i32_0 = arith.constant 0 : i32
    %c0_i32_1 = arith.constant 0 : i32
    return %c0_i32, %c0_i32_0 : i32, i32
  }
  func.func @transform_6(%arg0: i32, %arg1: i32) -> (i32, i32) {
    %c0_i32 = arith.constant 0 : i32
    %c0_i32_0 = arith.constant 0 : i32
    %c0_i32_1 = arith.constant 0 : i32
    return %c0_i32, %c0_i32_0 : i32, i32
  }
  func.func @transform_7(%arg0: i32, %arg1: i32) -> (i32, i32) {
    %c0_i32 = arith.constant 0 : i32
    %c0_i32_0 = arith.constant 0 : i32
    return %arg0, %c0_i32 : i32, i32
  }
}

</mosaic_0001>

<llo_original>
// kernel: tpu_custom_call.1
$region0: #{tpu_custom_call.1}
  #allocation0 [shape = 'u32[]', space=smem, size = 0x4, offset = 0x4, fixed_abs, tag = 'smem constant byte address 0x4 - core index']
  #allocation1 [shape = 'u32[144,128]{1,0:T(1,128)}', space=vmem, size = 0x12000, scoped, tag = 'internal scratch']
  %s0 = inlined_call_operand.vmem [shape: bf16[2,16,8], index: 0, kind: input, shape index: {}]
  %s1 = inlined_call_operand.vmem [shape: bf16[8,128], index: 1, kind: input, shape index: {}]
  %s2 = inlined_call_operand.vmem [shape: f32[1,128], index: 2, kind: input, shape index: {}]
  %s3 = inlined_call_operand.hbm [shape: bf16[128,128], index: 3, kind: input, shape index: {}]
  %s4 = inlined_call_operand.vmem [shape: f32[1,128], index: 4, kind: input, shape index: {}]
  %s5 = inlined_call_operand.hbm [shape: bf16[128,256], index: 5, kind: input, shape index: {}]
  %s6 = inlined_call_operand.vmem [shape: f32[1,256], index: 6, kind: input, shape index: {}]
  %s7 = inlined_call_operand.hbm [shape: f32[2,256], index: 7, kind: output, shape index: {}]
  %s8 = sld [smem:[#allocation0]]
  $region54: #{tpu_custom_call.1} parent=0
    _
  %s10 = ssub.s32 1, %s8
  %s11 = scalar_select 0, %s10, %s8
  $region1: #{tpu_custom_call.1} parent=0
    #allocation2 [shape = 'u8[32768]{0}', space=vmem, size = 0x8000, scoped, tag = 'input window, operand 3, single buffered']
    #allocation3 [shape = 's32[1]{0}', space=sflag, size = 0x4, scoped, tag = 'scoped memory for tpu_custom_call.1']
    #allocation4 [shape = 's32[1]{0}', space=sflag, size = 0x4, scoped, tag = 'scoped memory for tpu_custom_call.1']
    #allocation5 [shape = 'u8[65536]{0}', space=vmem, size = 0x10000, scoped, tag = 'input window, operand 5, single buffered']
    #allocation6 [shape = 's32[1]{0}', space=sflag, size = 0x4, scoped, tag = 'scoped memory for tpu_custom_call.1']
    #allocation7 [shape = 'u8[2048]{0}', space=vmem, size = 0x800, scoped, tag = 'output window, operand 0, single buffered']
    %12 = vsyncpa [#allocation3], 0
    %13 = vsyncpa [#allocation6], 0
    %14 = vsyncpa [#allocation4], 0
    // Predicated region
    $region2: #{tpu_custom_call.1} parent=1 // pred_check
      _
    $region3: #{tpu_custom_call.1} parent=1 // pred_check_branch
      %16 = sbr.rel (0) target = $region5
    $region4: #{tpu_custom_call.1} parent=1 // pred_region
      _
    $region5: #{tpu_custom_call.1} parent=1 // pred_fallthru
      _
    // Predicated region
    $region6: #{tpu_custom_call.1} parent=1 // pred_check
      _
    $region7: #{tpu_custom_call.1} parent=1 // pred_check_branch
      %18 = sbr.rel (0) target = $region9
    $region8: #{tpu_custom_call.1} parent=1 // pred_region
      _
    $region9: #{tpu_custom_call.1} parent=1 // pred_fallthru
      _
    // Predicated region
    $region10: #{tpu_custom_call.1} parent=1 // pred_check
      _
    $region11: #{tpu_custom_call.1} parent=1 // pred_check_branch
      %20 = sbr.rel (0) target = $region13
    $region12: #{tpu_custom_call.1} parent=1 // pred_region
      _
    $region13: #{tpu_custom_call.1} parent=1 // pred_fallthru
      _
    // Predicated region
    $region14: #{tpu_custom_call.1} parent=1 // pred_check
      _
    $region15: #{tpu_custom_call.1} parent=1 // pred_check_branch
      %22 = sbr.rel (0) target = $region17
    $region16: #{tpu_custom_call.1} parent=1 // pred_region
      %s24 = ssub.s32 1024, 1024
      %25 = vsyncadd [#allocation3], %s24
      %s26 = sshll.u32 [#allocation2], 4
      %s27 = int_to_ptr.vmem [resolvable:$true] %s26
      %32 = dma.hbm_to_vmem [thread:$0]  %s3, 1024, %s27, [#allocation3], 64, 64, 4
    $region17: #{tpu_custom_call.1} parent=1 // pred_fallthru
      _
    // Predicated region
    $region18: #{tpu_custom_call.1} parent=1 // pred_check
      _
    $region19: #{tpu_custom_call.1} parent=1 // pred_check_branch
      %34 = sbr.rel (0) target = $region21
    $region20: #{tpu_custom_call.1} parent=1 // pred_region
      _
    $region21: #{tpu_custom_call.1} parent=1 // pred_fallthru
      _
    // Predicated region
    $region22: #{tpu_custom_call.1} parent=1 // pred_check
      _
    $region23: #{tpu_custom_call.1} parent=1 // pred_check_branch
      %36 = sbr.rel (0) target = $region25
    $region24: #{tpu_custom_call.1} parent=1 // pred_region
      %s38 = ssub.s32 2048, 2048
      %39 = vsyncadd [#allocation6], %s38
      %s40 = sshll.u32 [#allocation5], 4
      %s41 = int_to_ptr.vmem [resolvable:$true] %s40
      %46 = dma.hbm_to_vmem [thread:$0]  %s5, 2048, %s41, [#allocation6], 128, 128, 8
    $region25: #{tpu_custom_call.1} parent=1 // pred_fallthru
      _
    // Predicated region
    $region26: #{tpu_custom_call.1} parent=1 // pred_check
      _
    $region27: #{tpu_custom_call.1} parent=1 // pred_check_branch
      %48 = sbr.rel (0) target = $region29
    $region28: #{tpu_custom_call.1} parent=1 // pred_region
      _
    $region29: #{tpu_custom_call.1} parent=1 // pred_fallthru
      _
    // Predicated region
    $region30: #{tpu_custom_call.1} parent=1 // pred_check
      _
    $region31: #{tpu_custom_call.1} parent=1 // pred_check_branch
      %50 = sbr.rel (0) target = $region33
    $region32: #{tpu_custom_call.1} parent=1 // pred_region
      %51 = dma.done [#allocation3], 1024
    $region33: #{tpu_custom_call.1} parent=1 // pred_fallthru
      _
    // Predicated region
    $region34: #{tpu_custom_call.1} parent=1 // pred_check
      _
    $region35: #{tpu_custom_call.1} parent=1 // pred_check_branch
      %53 = sbr.rel (0) target = $region37
    $region36: #{tpu_custom_call.1} parent=1 // pred_region
      %54 = dma.done [#allocation6], 2048
    $region37: #{tpu_custom_call.1} parent=1 // pred_fallthru
      _
    %v56 = vld [vmem:[%s0] sm:$0xf]
    %v57 = vld [vmem:[%s0 + $0x4] sm:$0xf]
    %v58 = vld [vmem:[%s0 + $0x8] sm:$0xf]
    %v59 = vld [vmem:[%s0 + $0xc] sm:$0xf]
    %v60 = vld [vmem:[%s1] sm:$0xf]
    %v61 = vld [vmem:[%s2] sm:$0x1]
    %v63 = vlaneseq
    %v64 = vshrl.u32 %v63, 7
    %v65 = vsub.s32 0, %v64
    %v66 = vrot.slane %v61, %v65
    %v72 = vunpack.c.l.b16 %v56
    %v73 = vunpack.c.l.b16 %v57
    %v74 = vunpack.c.l.b16 %v58
    %v75 = vunpack.c.l.b16 %v59
    %v76 = vpack.c.b16 %v73, %v72
    %v77 = vpack.c.b16 %v75, %v74
    %vm78 = vcmask 64512
    %v80 = vsel %vm78, %v76, 0
    %v83 = vsel %vm78, %v77, 0
    %vm85 = vcmask 1043456
    %v87 = vsel %vm85, %v60, 0
    %89 = vmatprep.subr.bf16.mxu0 0
    %90 = vmatpush1.bf16.msra.mxu0 %v87
    %91 = vmatprep.subr.bf16.mxu0 0
    %92 = vmatpush1.bf16.msra.mxu0 0
    %93 = vmatprep.subr.bf16.mxu0 0
    %94 = vmatpush1.bf16.msra.mxu0 0
    %95 = vmatprep.subr.bf16.mxu0 0
    %96 = vmatpush1.bf16.msra.mxu0 0
    %97 = vmatprep.subr.bf16.mxu0 0
    %98 = vmatpush1.bf16.msra.mxu0 0
    %99 = vmatprep.subr.bf16.mxu0 0
    %100 = vmatpush1.bf16.msra.mxu0 0
    %101 = vmatprep.subr.bf16.mxu0 0
    %102 = vmatpush1.bf16.msra.mxu0 0
    %103 = vmatprep.subr.bf16.mxu0 0
    %104 = vmatpush1.bf16.msra.mxu0 0
    %105 = vmatprep.subr.bf16.mxu0 0
    %106 = vmatpush1.bf16.msra.mxu0 0
    %107 = vmatprep.subr.bf16.mxu0 0
    %108 = vmatpush1.bf16.msra.mxu0 0
    %109 = vmatprep.subr.bf16.mxu0 0
    %110 = vmatpush1.bf16.msra.mxu0 0
    %111 = vmatprep.subr.bf16.mxu0 0
    %112 = vmatpush1.bf16.msra.mxu0 0
    %113 = vmatprep.subr.bf16.mxu0 0
    %114 = vmatpush1.bf16.msra.mxu0 0
    %115 = vmatprep.subr.bf16.mxu0 0
    %116 = vmatpush1.bf16.msra.mxu0 0
    %117 = vmatprep.subr.bf16.mxu0 0
    %118 = vmatpush1.bf16.msra.mxu0 0
    %119 = vmatprep.subr.bf16.mxu0 0
    %120 = vmatpush1.bf16.msra.mxu0 0
    %121 = vmatprep.mubr.bf16.mxu0 0
    %122 = vmatmul.mubr.bf16.gmra.mrb[0].mxu0 %v80
    %v123 = vpop.f32.mrb[0].mxu0
    %v124 = vadd.f32 %v66, %v123
    %v125 = vpop.f32.mrb[0].mxu0
    %v126 = vpop.f32.mrb[0].mxu0
    %v127 = vadd.f32 %v66, %v126
    %v128 = vpop.f32.mrb[0].mxu0
    %129 = vmatprep.mubr.bf16.mxu0 0
    %130 = vmatmul.mubr.bf16.gmra.mrb[0].mxu0 %v83
    %v131 = vpop.f32.mrb[0].mxu0
    %v132 = vadd.f32 %v66, %v131
    %v133 = vpop.f32.mrb[0].mxu0
    %v134 = vpop.f32.mrb[0].mxu0
    %v135 = vadd.f32 %v66, %v134
    %v136 = vpop.f32.mrb[0].mxu0
    %137 = vdwg.mxu0
    %v138 = vmax.f32 %v124, 0.0
    %v139 = vmax.f32 %v127, 0.0
    %v140 = vmax.f32 %v132, 0.0
    %v141 = vmax.f32 %v135, 0.0
    %v142 = vpack.c.bf16 %v139, %v138
    %v143 = vpack.c.bf16 %v141, %v140
    %v144 = vld [vmem:[#allocation2] sm:$0xf]
    %v145 = vld [vmem:[#allocation2 + $0x4] sm:$0xf]
    %v146 = vld [vmem:[#allocation2 + $0x8] sm:$0xf]
    %v147 = vld [vmem:[#allocation2 + $0xc] sm:$0xf]
    %v148 = vld [vmem:[#allocation2 + $0x10] sm:$0xf]
    %v149 = vld [vmem:[#allocation2 + $0x14] sm:$0xf]
    %v150 = vld [vmem:[#allocation2 + $0x18] sm:$0xf]
    %v151 = vld [vmem:[#allocation2 + $0x1c] sm:$0xf]
    %v152 = vld [vmem:[#allocation2 + $0x20] sm:$0xf]
    %v153 = vld [vmem:[#allocation2 + $0x24] sm:$0xf]
    %v154 = vld [vmem:[#allocation2 + $0x28] sm:$0xf]
    %v155 = vld [vmem:[#allocation2 + $0x2c] sm:$0xf]
    %v156 = vld [vmem:[#allocation2 + $0x30] sm:$0xf]
    %v157 = vld [vmem:[#allocation2 + $0x34] sm:$0xf]
    %v158 = vld [vmem:[#allocation2 + $0x38] sm:$0xf]
    %v159 = vld [vmem:[#allocation2 + $0x3c] sm:$0xf]
    %v160 = vld [vmem:[%s4] sm:$0x1]
    %v162 = vlaneseq
    %v163 = vshrl.u32 %v162, 7
    %v164 = vsub.s32 0, %v163
    %v165 = vrot.slane %v160, %v164
    %v183 = vunpack.c.l.b16 %v144
    %v184 = vunpack.c.l.b16 %v145
    %v185 = vunpack.c.l.b16 %v146
    %v186 = vunpack.c.l.b16 %v147
    %v187 = vunpack.c.l.b16 %v148
    %v188 = vunpack.c.l.b16 %v149
    %v189 = vunpack.c.l.b16 %v150
    %v190 = vunpack.c.l.b16 %v151
    %v191 = vunpack.c.l.b16 %v152
    %v192 = vunpack.c.l.b16 %v153
    %v193 = vunpack.c.l.b16 %v154
    %v194 = vunpack.c.l.b16 %v155
    %v195 = vunpack.c.l.b16 %v156
    %v196 = vunpack.c.l.b16 %v157
    %v197 = vunpack.c.l.b16 %v158
    %v198 = vunpack.c.l.b16 %v159
    %v199 = vpack.c.b16 %v184, %v183
    %v200 = vpack.c.b16 %v186, %v185
    %v201 = vpack.c.b16 %v188, %v187
    %v202 = vpack.c.b16 %v190, %v189
    %v203 = vpack.c.b16 %v192, %v191
    %v204 = vpack.c.b16 %v194, %v193
    %v205 = vpack.c.b16 %v196, %v195
    %v206 = vpack.c.b16 %v198, %v197
    %215 = vmatprep.subr.bf16.mxu0 0
    %216 = vmatpush1.bf16.msra.mxu0 %v199
    %217 = vmatprep.subr.bf16.mxu0 0
    %218 = vmatpush1.bf16.msra.mxu0 %v200
    %219 = vmatprep.subr.bf16.mxu0 0
    %220 = vmatpush1.bf16.msra.mxu0 %v201
    %221 = vmatprep.subr.bf16.mxu0 0
    %222 = vmatpush1.bf16.msra.mxu0 %v202
    %223 = vmatprep.subr.bf16.mxu0 0
    %224 = vmatpush1.bf16.msra.mxu0 %v203
    %225 = vmatprep.subr.bf16.mxu0 0
    %226 = vmatpush1.bf16.msra.mxu0 %v204
    %227 = vmatprep.subr.bf16.mxu0 0
    %228 = vmatpush1.bf16.msra.mxu0 %v205
    %229 = vmatprep.subr.bf16.mxu0 0
    %230 = vmatpush1.bf16.msra.mxu0 %v206
    %231 = vmatprep.subr.bf16.mxu0 0
    %232 = vmatpush1.bf16.msra.mxu0 0
    %233 = vmatprep.subr.bf16.mxu0 0
    %234 = vmatpush1.bf16.msra.mxu0 0
    %235 = vmatprep.subr.bf16.mxu0 0
    %236 = vmatpush1.bf16.msra.mxu0 0
    %237 = vmatprep.subr.bf16.mxu0 0
    %238 = vmatpush1.bf16.msra.mxu0 0
    %239 = vmatprep.subr.bf16.mxu0 0
    %240 = vmatpush1.bf16.msra.mxu0 0
    %241 = vmatprep.subr.bf16.mxu0 0
    %242 = vmatpush1.bf16.msra.mxu0 0
    %243 = vmatprep.subr.bf16.mxu0 0
    %244 = vmatpush1.bf16.msra.mxu0 0
    %245 = vmatprep.subr.bf16.mxu0 0
    %246 = vmatpush1.bf16.msra.mxu0 0
    %247 = vmatprep.mubr.bf16.mxu0 0
    %248 = vmatmul.mubr.bf16.gmra.mrb[0].mxu0 %v142
    %v249 = vpop.f32.mrb[0].mxu0
    %v250 = vadd.f32 %v165, %v249
    %v251 = vpop.f32.mrb[0].mxu0
    %v252 = vpop.f32.mrb[0].mxu0
    %v253 = vadd.f32 %v165, %v252
    %v254 = vpop.f32.mrb[0].mxu0
    %255 = vmatprep.mubr.bf16.mxu0 0
    %256 = vmatmul.mubr.bf16.gmra.mrb[0].mxu0 %v143
    %v257 = vpop.f32.mrb[0].mxu0
    %v258 = vadd.f32 %v165, %v257
    %v259 = vpop.f32.mrb[0].mxu0
    %v260 = vpop.f32.mrb[0].mxu0
    %v261 = vadd.f32 %v165, %v260
    %v262 = vpop.f32.mrb[0].mxu0
    %263 = vdwg.mxu0
    %v264 = vmax.f32 %v250, 0.0
    %v265 = vmax.f32 %v253, 0.0
    %v266 = vmax.f32 %v258, 0.0
    %v267 = vmax.f32 %v261, 0.0
    %v268 = vpack.c.bf16 %v265, %v264
    %v269 = vpack.c.bf16 %v267, %v266
    %v270 = vld [vmem:[#allocation5] sm:$0xff]
    %v271 = vld [vmem:[#allocation5 + $0x8] sm:$0xff]
    %v272 = vld [vmem:[#allocation5 + $0x10] sm:$0xff]
    %v273 = vld [vmem:[#allocation5 + $0x18] sm:$0xff]
    %v274 = vld [vmem:[#allocation5 + $0x20] sm:$0xff]
    %v275 = vld [vmem:[#allocation5 + $0x28] sm:$0xff]
    %v276 = vld [vmem:[#allocation5 + $0x30] sm:$0xff]
    %v277 = vld [vmem:[#allocation5 + $0x38] sm:$0xff]
    %v278 = vld [vmem:[#allocation5 + $0x40] sm:$0xff]
    %v279 = vld [vmem:[#allocation5 + $0x48] sm:$0xff]
    %v280 = vld [vmem:[#allocation5 + $0x50] sm:$0xff]
    %v281 = vld [vmem:[#allocation5 + $0x58] sm:$0xff]
    %v282 = vld [vmem:[#allocation5 + $0x60] sm:$0xff]
    %v283 = vld [vmem:[#allocation5 + $0x68] sm:$0xff]
    %v284 = vld [vmem:[#allocation5 + $0x70] sm:$0xff]
    %v285 = vld [vmem:[#allocation5 + $0x78] sm:$0xff]
    %v286 = vld [vmem:[%s6] sm:$0x3]
    %v288 = vlaneseq
    %v289 = vshrl.u32 %v288, 7
    %v290 = vsub.s32 0, %v289
    %v291 = vrot.slane %v286, %v290
    %v292 = vlaneseq
    %v293 = vshrl.u32 %v292, 7
    %v294 = vsub.s32 1, %v293
    %v295 = vrot.slane %v286, %v294
    %v314 = vunpack.c.l.b16 %v270
    %v315 = vunpack.c.h.b16 %v270
    %v316 = vunpack.c.l.b16 %v271
    %v317 = vunpack.c.h.b16 %v271
    %v318 = vunpack.c.l.b16 %v272
    %v319 = vunpack.c.h.b16 %v272
    %v320 = vunpack.c.l.b16 %v273
    %v321 = vunpack.c.h.b16 %v273
    %v322 = vunpack.c.l.b16 %v274
    %v323 = vunpack.c.h.b16 %v274
    %v324 = vunpack.c.l.b16 %v275
    %v325 = vunpack.c.h.b16 %v275
    %v326 = vunpack.c.l.b16 %v276
    %v327 = vunpack.c.h.b16 %v276
    %v328 = vunpack.c.l.b16 %v277
    %v329 = vunpack.c.h.b16 %v277
    %v330 = vunpack.c.l.b16 %v278
    %v331 = vunpack.c.h.b16 %v278
    %v332 = vunpack.c.l.b16 %v279
    %v333 = vunpack.c.h.b16 %v279
    %v334 = vunpack.c.l.b16 %v280
    %v335 = vunpack.c.h.b16 %v280
    %v336 = vunpack.c.l.b16 %v281
    %v337 = vunpack.c.h.b16 %v281
    %v338 = vunpack.c.l.b16 %v282
    %v339 = vunpack.c.h.b16 %v282
    %v340 = vunpack.c.l.b16 %v283
    %v341 = vunpack.c.h.b16 %v283
    %v342 = vunpack.c.l.b16 %v284
    %v343 = vunpack.c.h.b16 %v284
    %v344 = vunpack.c.l.b16 %v285
    %v345 = vunpack.c.h.b16 %v285
    %v346 = vpack.c.b16 %v316, %v314
    %v347 = vpack.c.b16 %v317, %v315
    %v348 = vpack.c.b16 %v320, %v318
    %v349 = vpack.c.b16 %v321, %v319
    %v350 = vpack.c.b16 %v324, %v322
    %v351 = vpack.c.b16 %v325, %v323
    %v352 = vpack.c.b16 %v328, %v326
    %v353 = vpack.c.b16 %v329, %v327
    %v354 = vpack.c.b16 %v332, %v330
    %v355 = vpack.c.b16 %v333, %v331
    %v356 = vpack.c.b16 %v336, %v334
    %v357 = vpack.c.b16 %v337, %v335
    %v358 = vpack.c.b16 %v340, %v338
    %v359 = vpack.c.b16 %v341, %v339
    %v360 = vpack.c.b16 %v344, %v342
    %v361 = vpack.c.b16 %v345, %v343
    %378 = vmatprep.subr.bf16.mxu0 %v347
    %379 = vmatpush1.bf16.msra.mxu0 %v346
    %380 = vmatprep.subr.bf16.mxu0 %v349
    %381 = vmatpush1.bf16.msra.mxu0 %v348
    %382 = vmatprep.subr.bf16.mxu0 %v351
    %383 = vmatpush1.bf16.msra.mxu0 %v350
    %384 = vmatprep.subr.bf16.mxu0 %v353
    %385 = vmatpush1.bf16.msra.mxu0 %v352
    %386 = vmatprep.subr.bf16.mxu0 %v355
    %387 = vmatpush1.bf16.msra.mxu0 %v354
    %388 = vmatprep.subr.bf16.mxu0 %v357
    %389 = vmatpush1.bf16.msra.mxu0 %v356
    %390 = vmatprep.subr.bf16.mxu0 %v359
    %391 = vmatpush1.bf16.msra.mxu0 %v358
    %392 = vmatprep.subr.bf16.mxu0 %v361
    %393 = vmatpush1.bf16.msra.mxu0 %v360
    %394 = vmatprep.subr.bf16.mxu0 0
    %395 = vmatpush1.bf16.msra.mxu0 0
    %396 = vmatprep.subr.bf16.mxu0 0
    %397 = vmatpush1.bf16.msra.mxu0 0
    %398 = vmatprep.subr.bf16.mxu0 0
    %399 = vmatpush1.bf16.msra.mxu0 0
    %400 = vmatprep.subr.bf16.mxu0 0
    %401 = vmatpush1.bf16.msra.mxu0 0
    %402 = vmatprep.subr.bf16.mxu0 0
    %403 = vmatpush1.bf16.msra.mxu0 0
    %404 = vmatprep.subr.bf16.mxu0 0
    %405 = vmatpush1.bf16.msra.mxu0 0
    %406 = vmatprep.subr.bf16.mxu0 0
    %407 = vmatpush1.bf16.msra.mxu0 0
    %408 = vmatprep.subr.bf16.mxu0 0
    %409 = vmatpush1.bf16.msra.mxu0 0
    %410 = vmatprep.mubr.bf16.mxu0 0
    %411 = vmatmul.mubr.bf16.gmra.mrb[0].mxu0 %v268
    %v412 = vpop.f32.mrb[0].mxu0
    %v413 = vadd.f32 %v291, %v412
    %v414 = vpop.f32.mrb[0].mxu0
    %v415 = vadd.f32 %v295, %v414
    %v416 = vpop.f32.mrb[0].mxu0
    %v417 = vadd.f32 %v291, %v416
    %v418 = vpop.f32.mrb[0].mxu0
    %v419 = vadd.f32 %v295, %v418
    %420 = vmatprep.mubr.bf16.mxu0 0
    %421 = vmatmul.mubr.bf16.gmra.mrb[0].mxu0 %v269
    %v422 = vpop.f32.mrb[0].mxu0
    %v423 = vadd.f32 %v291, %v422
    %v424 = vpop.f32.mrb[0].mxu0
    %v425 = vadd.f32 %v295, %v424
    %v426 = vpop.f32.mrb[0].mxu0
    %v427 = vadd.f32 %v291, %v426
    %v428 = vpop.f32.mrb[0].mxu0
    %v429 = vadd.f32 %v295, %v428
    %430 = vdwg.mxu0
    %v431 = vmax.f32 %v413, 0.0
    %v432 = vmax.f32 %v415, 0.0
    %v433 = vmax.f32 %v417, 0.0
    %v434 = vmax.f32 %v419, 0.0
    %v435 = vmax.f32 %v423, 0.0
    %v436 = vmax.f32 %v425, 0.0
    %v437 = vmax.f32 %v427, 0.0
    %v438 = vmax.f32 %v429, 0.0
    %v439 = vmax.f32 %v431, %v433
    %v440 = vrot.slane %v439, 4
    %v441 = vmax.f32 %v439, %v440
    %v442 = vrot.slane %v441, 2
    %v443 = vmax.f32 %v441, %v442
    %v444 = vrot.slane %v443, 1
    %v445 = vmax.f32 %v443, %v444
    %v446 = vmax.f32 %v432, %v434
    %v447 = vrot.slane %v446, 4
    %v448 = vmax.f32 %v446, %v447
    %v449 = vrot.slane %v448, 2
    %v450 = vmax.f32 %v448, %v449
    %v451 = vrot.slane %v450, 1
    %v452 = vmax.f32 %v450, %v451
    %v453 = vmax.f32 %v435, %v437
    %v454 = vrot.slane %v453, 4
    %v455 = vmax.f32 %v453, %v454
    %v456 = vrot.slane %v455, 2
    %v457 = vmax.f32 %v455, %v456
    %v458 = vrot.slane %v457, 1
    %v459 = vmax.f32 %v457, %v458
    %v460 = vmax.f32 %v436, %v438
    %v461 = vrot.slane %v460, 4
    %v462 = vmax.f32 %v460, %v461
    %v463 = vrot.slane %v462, 2
    %v464 = vmax.f32 %v462, %v463
    %v465 = vrot.slane %v464, 1
    %v466 = vmax.f32 %v464, %v465
    %p467 = scmp.eq.s32.totalorder 0, 0
    // Predicated region
    $region38: #{tpu_custom_call.1} parent=1 // pred_check
      %p468 = pneg %p467
    $region39: #{tpu_custom_call.1} parent=1 // pred_check_branch
      %470 = sbr.rel (%p468) target = $region41
    $region40: #{tpu_custom_call.1} parent=1 // pred_region
      %v475 = vcombine.low %v445, %v452
      %v477 = vunpack.c.l.s4 1983009808
      %v478 = vunpack.c.0.s8 %v477
      %v479 = vlaneseq
      %v480 = vshrl.u32 %v479, 7
      %v481 = vsub.s32 %v478, %v480
      %v482 = vrot.slane %v475, %v481
      %v483 = vcombine.low %v459, %v466
      %v485 = vunpack.c.l.s4 1983009808
      %v486 = vunpack.c.0.s8 %v485
      %v487 = vlaneseq
      %v488 = vshrl.u32 %v487, 7
      %v489 = vsub.s32 %v486, %v488
      %v490 = vrot.slane %v483, %v489
      %vm491 = vcmask 1044484
      %v492 = vsel %vm491, %v482, %v482
      %vm493 = vcmask 1046534
      %v494 = vsel %vm493, %v482, %v492
      %v495 = vrot.slane %v490, 7
      %vm496 = vcmask 1041409
      %v497 = vsel %vm496, %v495, %v494
      %vm498 = vcmask 1043459
      %v499 = vsel %vm498, %v495, %v497
      %vm500 = vcmask 1045509
      %v501 = vsel %vm500, %v495, %v499
      %vm502 = vcmask 1047559
      %v503 = vsel %vm502, %v495, %v501
      %505 = vst [vmem:[#allocation7] sm:$0xf] %v503
    $region41: #{tpu_custom_call.1} parent=1 // pred_fallthru
      _
    %p506 = scmp.gt.s32.totalorder 0, 0
    // Predicated region
    $region42: #{tpu_custom_call.1} parent=1 // pred_check
      %p507 = pneg %p506
    $region43: #{tpu_custom_call.1} parent=1 // pred_check_branch
      %509 = sbr.rel (%p507) target = $region45
    $region44: #{tpu_custom_call.1} parent=1 // pred_region
      %v510 = vld [vmem:[#allocation7] sm:$0xf]
      %v515 = vcombine.low %v445, %v452
      %v517 = vunpack.c.l.s4 1983009808
      %v518 = vunpack.c.0.s8 %v517
      %v519 = vlaneseq
      %v520 = vshrl.u32 %v519, 7
      %v521 = vsub.s32 %v518, %v520
      %v522 = vrot.slane %v515, %v521
      %v523 = vcombine.low %v459, %v466
      %v525 = vunpack.c.l.s4 1983009808
      %v526 = vunpack.c.0.s8 %v525
      %v527 = vlaneseq
      %v528 = vshrl.u32 %v527, 7
      %v529 = vsub.s32 %v526, %v528
      %v530 = vrot.slane %v523, %v529
      %vm531 = vcmask 1044484
      %v532 = vsel %vm531, %v522, %v522
      %vm533 = vcmask 1046534
      %v534 = vsel %vm533, %v522, %v532
      %v535 = vrot.slane %v530, 7
      %vm536 = vcmask 1041409
      %v537 = vsel %vm536, %v535, %v534
      %vm538 = vcmask 1043459
      %v539 = vsel %vm538, %v535, %v537
      %vm540 = vcmask 1045509
      %v541 = vsel %vm540, %v535, %v539
      %vm542 = vcmask 1047559
      %v543 = vsel %vm542, %v535, %v541
      %v545 = vmax.f32 %v510, %v543
      %546 = vst [vmem:[#allocation7] sm:$0xf] %v545
    $region45: #{tpu_custom_call.1} parent=1 // pred_fallthru
      _
    // Predicated region
    $region46: #{tpu_custom_call.1} parent=1 // pred_check
      _
    $region47: #{tpu_custom_call.1} parent=1 // pred_check_branch
      %548 = sbr.rel (0) target = $region49
    $region48: #{tpu_custom_call.1} parent=1 // pred_region
      %s550 = ssub.s32 64, 64
      %551 = vsyncadd [#allocation4], %s550
      %s553 = sshll.u32 [#allocation7], 4
      %s554 = int_to_ptr.vmem [resolvable:$true] %s553
      %556 = dma.vmem_to_hbm [thread:$0]  %s554, 64, %s7, [#allocation4]
    $region49: #{tpu_custom_call.1} parent=1 // pred_fallthru
      _
    // Predicated region
    $region50: #{tpu_custom_call.1} parent=1 // pred_check
      _
    $region51: #{tpu_custom_call.1} parent=1 // pred_check_branch
      %558 = sbr.rel (0) target = $region53
    $region52: #{tpu_custom_call.1} parent=1 // pred_region
      %559 = dma.done [#allocation4], 64
    $region53: #{tpu_custom_call.1} parent=1 // pred_fallthru
      _
    %560 = vsyncpa [#allocation3], 1
    %561 = vsyncpa [#allocation6], 1
    %562 = vsyncpa [#allocation4], 1

</llo_original>
